<compile_context>
chip_gen: v5e
topology: v5e:2x2
jax: 0.10.0
libtpu: 0.0.40
codegen_flags: <defaults>
</compile_context>

<pallas_src>
import functools

import jax
import jax.numpy as jnp
from jax.experimental import pallas as pl
from jax.experimental.pallas import tpu as pltpu

IN_DIM = 784
HID_DIM = 128
OUT_DIM = 10


def _round_up(n, m):
    return ((n + m - 1) // m) * m


def _pick_tile(batch, block_b):
    # Sublane-aligned (multiple of 8), capped at block_b, and capped at
    # ceil(B/2) so B > 8 always yields >= 2 independent tiles (v7x megacore).
    half = _round_up(max((batch + 1) // 2, 1), 8)
    return max(8, min(block_b, half))


def mlp_kernel(x_ref, w1_ref, b1_ref, w2_ref, b2_ref, o_ref):
    # fc1: (tb, 784) @ (784, 128) -> (tb, 128), f32 accumulation on the MXU.
    h = jnp.dot(x_ref[...], w1_ref[...], preferred_element_type=jnp.float32)
    h = jnp.maximum(h + b1_ref[...], 0.0)          # bias + ReLU on the VPU (f32)
    # fc2: (tb, 128) @ (128, 10) -> (tb, 10); 10-wide store is a masked vst,
    # trivial next to the x DMA stream that dominates this kernel.
    out = jnp.dot(h, w2_ref[...], preferred_element_type=jnp.float32)
    o_ref[...] = (out + b2_ref[...]).astype(o_ref.dtype)


@functools.partial(jax.jit, static_argnames=("block_b",))
def simple_nn_forward(x, w1, b1, w2, b2, *, block_b=1024):
    """x: (B, 784); w1: (784, 128); b1: (1, 128); w2: (128, 10); b2: (1, 10).

    x / w1 may be f32 or bf16 (cast them *outside* this function, e.g. via
    prepare_params, so no extra HBM pass happens per call). Output is f32.
    """
    B = x.shape[0]
    tb = _pick_tile(B, block_b)
    n_tiles = pl.cdiv(B, tb)

    grid_spec = pl.GridSpec(
        grid=(n_tiles,),
        in_specs=[
            pl.BlockSpec((tb, IN_DIM), lambda i: (i, 0)),        # streamed x tile
            pl.BlockSpec((IN_DIM, HID_DIM), lambda i: (0, 0)),   # resident weights
            pl.BlockSpec((1, HID_DIM), lambda i: (0, 0)),
            pl.BlockSpec((HID_DIM, OUT_DIM), lambda i: (0, 0)),
            pl.BlockSpec((1, OUT_DIM), lambda i: (0, 0)),
        ],
        out_specs=pl.BlockSpec((tb, OUT_DIM), lambda i: (i, 0)),
    )

    x_bytes = jnp.dtype(x.dtype).itemsize
    w1_bytes = jnp.dtype(w1.dtype).itemsize

    # VMEM budget: x tile double-buffered dominates; give headroom and keep the
    # limit inside every generation's physical VMEM (v7x: 64 MiB, v5e: 128 MiB).
    vmem_need = (
        2 * tb * IN_DIM * x_bytes          # x (double-buffered)
        + 2 * IN_DIM * HID_DIM * w1_bytes  # w1
        + 2 * tb * 128 * 4                 # output block (lane-padded, dbl-buf)
        + 2 * tb * HID_DIM * 4             # hidden intermediate headroom
        + 8 * HID_DIM * 128 * 4            # w2 / biases / slack
    )
    vmem_limit = int(min(max(vmem_need + (8 << 20), 32 << 20), 48 << 20))

    cost = pl.CostEstimate(
        flops=2 * B * (IN_DIM * HID_DIM + HID_DIM * OUT_DIM),
        transcendentals=0,
        bytes_accessed=(
            B * IN_DIM * x_bytes           # x stream (dominant)
            + IN_DIM * HID_DIM * w1_bytes  # w1
            + HID_DIM * OUT_DIM * 4        # w2
            + (HID_DIM + OUT_DIM) * 4      # biases
            + B * OUT_DIM * 4              # output (10-wide)
        ),
    )

    return pl.pallas_call(
        mlp_kernel,
        out_shape=jax.ShapeDtypeStruct((B, OUT_DIM), jnp.float32),
        grid_spec=grid_spec,
        compiler_params=pltpu.CompilerParams(
            dimension_semantics=("parallel",),   # independent batch tiles
            vmem_limit_bytes=vmem_limit,
        ),
        cost_estimate=cost,
    )(x, w1, b1, w2, b2)


def prepare_params(w1, b1, w2, b2, dtype=jnp.float32):
    """One-time parameter prep (call once, outside the per-step jit).

    Only the fc1 weight (part of the big HBM stream) is cast to `dtype`;
    biases and fc2 stay f32 (accumulation is f32 everywhere)."""
    return (
        jnp.asarray(w1, dtype),
        jnp.asarray(b1, jnp.float32),
        jnp.asarray(w2, jnp.float32),
        jnp.asarray(b2, jnp.float32),
    )


def init_params(key):
    """Deterministic init matching nn.Linear shapes (weights stored transposed)."""
    k1, k2, k3, k4 = jax.random.split(key, 4)
    # PyTorch nn.Linear default: U(-1/sqrt(fan_in), 1/sqrt(fan_in))
    lim1 = 1.0 / jnp.sqrt(jnp.float32(IN_DIM))
    lim2 = 1.0 / jnp.sqrt(jnp.float32(HID_DIM))
    w1 = jax.random.uniform(k1, (IN_DIM, HID_DIM), jnp.float32, -lim1, lim1)
    b1 = jax.random.uniform(k2, (1, HID_DIM), jnp.float32, -lim1, lim1)
    w2 = jax.random.uniform(k3, (HID_DIM, OUT_DIM), jnp.float32, -lim2, lim2)
    b2 = jax.random.uniform(k4, (1, OUT_DIM), jnp.float32, -lim2, lim2)
    return w1, b1, w2, b2


if __name__ == "__main__":
    key = jax.random.PRNGKey(0)
    k_x, k_p, k_x2 = jax.random.split(key, 3)
    w1, b1, w2, b2 = init_params(k_p)

    # --- small-batch check (single tile), f32 path ---
    B = 8
    x = jax.random.normal(k_x, (B, IN_DIM), jnp.float32)
    out = jax.block_until_ready(simple_nn_forward(x, w1, b1, w2, b2))
    ref = jnp.maximum(x @ w1 + b1, 0.0) @ w2 + b2
    assert out.shape == (B, OUT_DIM)
    assert jnp.allclose(out, ref, atol=2e-4, rtol=2e-4)

    # --- ragged multi-tile check (1000 rows -> 2 tiles of 504/496, no padding) ---
    B2 = 1000
    x2 = jax.random.normal(k_x2, (B2, IN_DIM), jnp.float32)
    out2 = jax.block_until_ready(simple_nn_forward(x2, w1, b1, w2, b2))
    ref2 = jnp.maximum(x2 @ w1 + b1, 0.0) @ w2 + b2
    assert out2.shape == (B2, OUT_DIM)
    assert jnp.allclose(out2, ref2, atol=2e-4, rtol=2e-4)

    # --- bf16-input path (x and w1 already bf16 at the API boundary) ---
    w1_bf, b1_f, w2_f, b2_f = prepare_params(w1, b1, w2, b2, dtype=jnp.bfloat16)
    x_bf = x.astype(jnp.bfloat16)
    out_bf = jax.block_until_ready(
        simple_nn_forward(x_bf, w1_bf, b1_f, w2_f, b2_f)
    )
    h_ref = jnp.maximum(
        jnp.dot(x_bf, w1_bf, preferred_element_type=jnp.float32) + b1, 0.0
    )
    ref_bf = jnp.dot(h_ref, w2, preferred_element_type=jnp.float32) + b2
    assert out_bf.shape == (B, OUT_DIM)
    assert jnp.allclose(out_bf, ref_bf, atol=2e-2, rtol=2e-2)

    print("KERNEL_OK")
</pallas_src>

<mosaic_0001>
module attributes {stable_mosaic.version = 11 : i64} {
  func.func @mlp_kernel(%arg0: i32, %arg1: memref<8x784xf32, #tpu.memory_space<vmem>>, %arg2: memref<784x128xf32, #tpu.memory_space<vmem>>, %arg3: memref<1x128xf32, #tpu.memory_space<vmem>>, %arg4: memref<128x10xf32, #tpu.memory_space<vmem>>, %arg5: memref<1x10xf32, #tpu.memory_space<vmem>>, %arg6: memref<8x10xf32, #tpu.memory_space<vmem>>) attributes {dimension_semantics = [#tpu.dimension_semantics<parallel>], iteration_bounds = array<i64: 1>, scalar_prefetch = 0 : i64, scratch_operands = 0 : i64, tpu.core_type = #tpu.core_type<tc>, window_params = [{transform_indices = @transform_0, window_bounds = array<i64: 8, 784>}, {pipeline_mode = #tpu.pipeline_mode<synchronous>, transform_indices = @transform_1, window_bounds = array<i64: 784, 128>}, {pipeline_mode = #tpu.pipeline_mode<synchronous>, transform_indices = @transform_2, window_bounds = array<i64: 1, 128>}, {pipeline_mode = #tpu.pipeline_mode<synchronous>, transform_indices = @transform_3, window_bounds = array<i64: 128, 10>}, {pipeline_mode = #tpu.pipeline_mode<synchronous>, transform_indices = @transform_4, window_bounds = array<i64: 1, 10>}, {transform_indices = @transform_5, window_bounds = array<i64: 8, 10>}]} {
    %c0 = arith.constant 0 : index
    %c0_0 = arith.constant 0 : index
    %0 = vector.load %arg1[%c0, %c0_0] : memref<8x784xf32, #tpu.memory_space<vmem>>, vector<8x784xf32>
    %c0_1 = arith.constant 0 : index
    %c0_2 = arith.constant 0 : index
    %1 = vector.load %arg2[%c0_1, %c0_2] : memref<784x128xf32, #tpu.memory_space<vmem>>, vector<784x128xf32>
    %cst = arith.constant dense<0.000000e+00> : vector<8x128xf32>
    %2 = tpu.matmul %0, %1, %cst {dimension_numbers = #tpu.dot_dimension_numbers<[1], [0], [0], [1], [0, 0, 1, 1], [], []>} : vector<8x784xf32>, vector<784x128xf32>, vector<8x128xf32> -> vector<8x128xf32>
    %c0_3 = arith.constant 0 : index
    %c0_4 = arith.constant 0 : index
    %3 = vector.load %arg3[%c0_3, %c0_4] : memref<1x128xf32, #tpu.memory_space<vmem>>, vector<1x128xf32>
    %4 = vector.broadcast %3 : vector<1x128xf32> to vector<8x128xf32>
    %5 = arith.addf %2, %4 : vector<8x128xf32>
    %cst_5 = arith.constant 0.000000e+00 : f32
    %6 = vector.broadcast %cst_5 : f32 to vector<8x128xf32>
    %7 = arith.maximumf %5, %6 : vector<8x128xf32>
    %c0_6 = arith.constant 0 : index
    %c0_7 = arith.constant 0 : index
    %8 = vector.load %arg4[%c0_6, %c0_7] : memref<128x10xf32, #tpu.memory_space<vmem>>, vector<128x10xf32>
    %cst_8 = arith.constant dense<0.000000e+00> : vector<8x10xf32>
    %9 = tpu.matmul %7, %8, %cst_8 {dimension_numbers = #tpu.dot_dimension_numbers<[1], [0], [0], [1], [0, 0, 1, 1], [], []>} : vector<8x128xf32>, vector<128x10xf32>, vector<8x10xf32> -> vector<8x10xf32>
    %c0_9 = arith.constant 0 : index
    %c0_10 = arith.constant 0 : index
    %10 = vector.load %arg5[%c0_9, %c0_10] : memref<1x10xf32, #tpu.memory_space<vmem>>, vector<1x10xf32>
    %11 = vector.broadcast %10 : vector<1x10xf32> to vector<8x10xf32>
    %12 = arith.addf %9, %11 : vector<8x10xf32>
    %c0_11 = arith.constant 0 : index
    %c0_12 = arith.constant 0 : index
    %13 = vector.load %arg6[%c0_11, %c0_12] : memref<8x10xf32, #tpu.memory_space<vmem>>, vector<8x10xf32>
    tpu.vector_store %arg6[%c0_11, %c0_12], %12 {strides = array<i32>} : memref<8x10xf32, #tpu.memory_space<vmem>>, vector<8x10xf32>,
    return
  }
  func.func @transform_0(%arg0: i32) -> (i32, i32) {
    %c0_i32 = arith.constant 0 : i32
    %c0_i32_0 = arith.constant 0 : i32
    return %arg0, %c0_i32 : i32, i32
  }
  func.func @transform_1(%arg0: i32) -> (i32, i32) {
    %c0_i32 = arith.constant 0 : i32
    %c0_i32_0 = arith.constant 0 : i32
    %c0_i32_1 = arith.constant 0 : i32
    return %c0_i32, %c0_i32_0 : i32, i32
  }
  func.func @transform_2(%arg0: i32) -> (i32, i32) {
    %c0_i32 = arith.constant 0 : i32
    %c0_i32_0 = arith.constant 0 : i32
    %c0_i32_1 = arith.constant 0 : i32
    return %c0_i32, %c0_i32_0 : i32, i32
  }
  func.func @transform_3(%arg0: i32) -> (i32, i32) {
    %c0_i32 = arith.constant 0 : i32
    %c0_i32_0 = arith.constant 0 : i32
    %c0_i32_1 = arith.constant 0 : i32
    return %c0_i32, %c0_i32_0 : i32, i32
  }
  func.func @transform_4(%arg0: i32) -> (i32, i32) {
    %c0_i32 = arith.constant 0 : i32
    %c0_i32_0 = arith.constant 0 : i32
    %c0_i32_1 = arith.constant 0 : i32
    return %c0_i32, %c0_i32_0 : i32, i32
  }
  func.func @transform_5(%arg0: i32) -> (i32, i32) {
    %c0_i32 = arith.constant 0 : i32
    %c0_i32_0 = arith.constant 0 : i32
    return %arg0, %c0_i32 : i32, i32
  }
}

</mosaic_0001>

<llo_original>
// kernel: simple_nn_forward.1
$region0: #{simple_nn_forward.1}
  #allocation0 [shape = 'u32[]', space=smem, size = 0x4, offset = 0x4, fixed_abs, tag = 'smem constant byte address 0x4 - core index']
  #allocation1 [shape = 'u32[72,128]{1,0:T(1,128)}', space=vmem, size = 0x9000, scoped, tag = 'internal scratch']
  %s0 = inlined_call_operand.vmem [shape: f32[8,784], index: 0, kind: input, shape index: {}]
  %s1 = inlined_call_operand.hbm [shape: f32[784,128], index: 1, kind: input, shape index: {}]
  %s2 = inlined_call_operand.vmem [shape: f32[1,128], index: 2, kind: input, shape index: {}]
  %s3 = inlined_call_operand.vmem [shape: f32[128,10], index: 3, kind: input, shape index: {}]
  %s4 = inlined_call_operand.vmem [shape: f32[1,10], index: 4, kind: input, shape index: {}]
  %s5 = inlined_call_operand.hbm [shape: f32[8,10], index: 5, kind: output, shape index: {}]
  %s6 = sld [smem:[#allocation0]]
  $region34: #{simple_nn_forward.1} parent=0
    _
  %s8 = ssub.s32 1, %s6
  %s9 = scalar_select 0, %s8, %s6
  $region1: #{simple_nn_forward.1} parent=0
    #allocation2 [shape = 'u8[401408]{0}', space=vmem, size = 0x62000, scoped, tag = 'input window, operand 1, single buffered']
    #allocation3 [shape = 's32[1]{0}', space=sflag, size = 0x4, scoped, tag = 'scoped memory for simple_nn_forward.1']
    #allocation4 [shape = 's32[1]{0}', space=sflag, size = 0x4, scoped, tag = 'scoped memory for simple_nn_forward.1']
    #allocation5 [shape = 'u8[4096]{0}', space=vmem, size = 0x1000, scoped, tag = 'output window, operand 0, single buffered']
    %10 = vsyncpa [#allocation3], 0
    %11 = vsyncpa [#allocation4], 0
    // Predicated region
    $region2: #{simple_nn_forward.1} parent=1 // pred_check
      _
    $region3: #{simple_nn_forward.1} parent=1 // pred_check_branch
      %13 = sbr.rel (0) target = $region5
    $region4: #{simple_nn_forward.1} parent=1 // pred_region
      _
    $region5: #{simple_nn_forward.1} parent=1 // pred_fallthru
      _
    // Predicated region
    $region6: #{simple_nn_forward.1} parent=1 // pred_check
      _
    $region7: #{simple_nn_forward.1} parent=1 // pred_check_branch
      %15 = sbr.rel (0) target = $region9
    $region8: #{simple_nn_forward.1} parent=1 // pred_region
      %17 = vsyncadd [#allocation3], 0
      %s18 = sshll.u32 %s1, 4
      %s19 = int_to_ptr.hbm [resolvable:$true] %s18
      %s20 = sshll.u32 [#allocation2], 4
      %s21 = int_to_ptr.vmem [resolvable:$true] %s20
      %26 = dma.hbm_to_vmem [thread:$0]  %s19, 12544, %s21, [#allocation3], 128, 128, 8
    $region9: #{simple_nn_forward.1} parent=1 // pred_fallthru
      _
    // Predicated region
    $region10: #{simple_nn_forward.1} parent=1 // pred_check
      _
    $region11: #{simple_nn_forward.1} parent=1 // pred_check_branch
      %28 = sbr.rel (0) target = $region13
    $region12: #{simple_nn_forward.1} parent=1 // pred_region
      _
    $region13: #{simple_nn_forward.1} parent=1 // pred_fallthru
      _
    // Predicated region
    $region14: #{simple_nn_forward.1} parent=1 // pred_check
      _
    $region15: #{simple_nn_forward.1} parent=1 // pred_check_branch
      %30 = sbr.rel (0) target = $region17
    $region16: #{simple_nn_forward.1} parent=1 // pred_region
      _
    $region17: #{simple_nn_forward.1} parent=1 // pred_fallthru
      _
    // Predicated region
    $region18: #{simple_nn_forward.1} parent=1 // pred_check
      _
    $region19: #{simple_nn_forward.1} parent=1 // pred_check_branch
      %32 = sbr.rel (0) target = $region21
    $region20: #{simple_nn_forward.1} parent=1 // pred_region
      _
    $region21: #{simple_nn_forward.1} parent=1 // pred_fallthru
      _
    // Predicated region
    $region22: #{simple_nn_forward.1} parent=1 // pred_check
      _
    $region23: #{simple_nn_forward.1} parent=1 // pred_check_branch
      %34 = sbr.rel (0) target = $region25
    $region24: #{simple_nn_forward.1} parent=1 // pred_region
      %36 = dma.done [#allocation3], 12544
    $region25: #{simple_nn_forward.1} parent=1 // pred_fallthru
      _
    %v37 = vld [vmem:[%s0] sm:$0xff]
    %v38 = vld [vmem:[%s0 + $0x8] sm:$0xff]
    %v39 = vld [vmem:[%s0 + $0x10] sm:$0xff]
    %v40 = vld [vmem:[%s0 + $0x18] sm:$0xff]
    %v41 = vld [vmem:[%s0 + $0x20] sm:$0xff]
    %v42 = vld [vmem:[%s0 + $0x28] sm:$0xff]
    %v43 = vld [vmem:[%s0 + $0x30] sm:$0xff]
    %v44 = vld [vmem:[#allocation2] sm:$0xff]
    %v45 = vld [vmem:[#allocation2 + $0x8] sm:$0xff]
    %v46 = vld [vmem:[#allocation2 + $0x10] sm:$0xff]
    %v47 = vld [vmem:[#allocation2 + $0x18] sm:$0xff]
    %v48 = vld [vmem:[#allocation2 + $0x20] sm:$0xff]
    %v49 = vld [vmem:[#allocation2 + $0x28] sm:$0xff]
    %v50 = vld [vmem:[#allocation2 + $0x30] sm:$0xff]
    %v51 = vld [vmem:[#allocation2 + $0x38] sm:$0xff]
    %v52 = vld [vmem:[#allocation2 + $0x40] sm:$0xff]
    %v53 = vld [vmem:[#allocation2 + $0x48] sm:$0xff]
    %v54 = vld [vmem:[#allocation2 + $0x50] sm:$0xff]
    %v55 = vld [vmem:[#allocation2 + $0x58] sm:$0xff]
    %v56 = vld [vmem:[#allocation2 + $0x60] sm:$0xff]
    %v57 = vld [vmem:[#allocation2 + $0x68] sm:$0xff]
    %v58 = vld [vmem:[#allocation2 + $0x70] sm:$0xff]
    %v59 = vld [vmem:[#allocation2 + $0x78] sm:$0xff]
    %v60 = vld [vmem:[#allocation2 + $0x80] sm:$0xff]
    %v61 = vld [vmem:[#allocation2 + $0x88] sm:$0xff]
    %v62 = vld [vmem:[#allocation2 + $0x90] sm:$0xff]
    %v63 = vld [vmem:[#allocation2 + $0x98] sm:$0xff]
    %v64 = vld [vmem:[#allocation2 + $0xa0] sm:$0xff]
    %v65 = vld [vmem:[#allocation2 + $0xa8] sm:$0xff]
    %v66 = vld [vmem:[#allocation2 + $0xb0] sm:$0xff]
    %v67 = vld [vmem:[#allocation2 + $0xb8] sm:$0xff]
    %v68 = vld [vmem:[#allocation2 + $0xc0] sm:$0xff]
    %v69 = vld [vmem:[#allocation2 + $0xc8] sm:$0xff]
    %v70 = vld [vmem:[#allocation2 + $0xd0] sm:$0xff]
    %v71 = vld [vmem:[#allocation2 + $0xd8] sm:$0xff]
    %v72 = vld [vmem:[#allocation2 + $0xe0] sm:$0xff]
    %v73 = vld [vmem:[#allocation2 + $0xe8] sm:$0xff]
    %v74 = vld [vmem:[#allocation2 + $0xf0] sm:$0xff]
    %v75 = vld [vmem:[#allocation2 + $0xf8] sm:$0xff]
    %v76 = vld [vmem:[#allocation2 + $0x100] sm:$0xff]
    %v77 = vld [vmem:[#allocation2 + $0x108] sm:$0xff]
    %v78 = vld [vmem:[#allocation2 + $0x110] sm:$0xff]
    %v79 = vld [vmem:[#allocation2 + $0x118] sm:$0xff]
    %v80 = vld [vmem:[#allocation2 + $0x120] sm:$0xff]
    %v81 = vld [vmem:[#allocation2 + $0x128] sm:$0xff]
    %v82 = vld [vmem:[#allocation2 + $0x130] sm:$0xff]
    %v83 = vld [vmem:[#allocation2 + $0x138] sm:$0xff]
    %v84 = vld [vmem:[#allocation2 + $0x140] sm:$0xff]
    %v85 = vld [vmem:[#allocation2 + $0x148] sm:$0xff]
    %v86 = vld [vmem:[#allocation2 + $0x150] sm:$0xff]
    %v87 = vld [vmem:[#allocation2 + $0x158] sm:$0xff]
    %v88 = vld [vmem:[#allocation2 + $0x160] sm:$0xff]
    %v89 = vld [vmem:[#allocation2 + $0x168] sm:$0xff]
    %v90 = vld [vmem:[#allocation2 + $0x170] sm:$0xff]
    %v91 = vld [vmem:[#allocation2 + $0x178] sm:$0xff]
    %v92 = vld [vmem:[#allocation2 + $0x180] sm:$0xff]
    %v93 = vld [vmem:[#allocation2 + $0x188] sm:$0xff]
    %v94 = vld [vmem:[#allocation2 + $0x190] sm:$0xff]
    %v95 = vld [vmem:[#allocation2 + $0x198] sm:$0xff]
    %v96 = vld [vmem:[#allocation2 + $0x1a0] sm:$0xff]
    %v97 = vld [vmem:[#allocation2 + $0x1a8] sm:$0xff]
    %v98 = vld [vmem:[#allocation2 + $0x1b0] sm:$0xff]
    %v99 = vld [vmem:[#allocation2 + $0x1b8] sm:$0xff]
    %v100 = vld [vmem:[#allocation2 + $0x1c0] sm:$0xff]
    %v101 = vld [vmem:[#allocation2 + $0x1c8] sm:$0xff]
    %v102 = vld [vmem:[#allocation2 + $0x1d0] sm:$0xff]
    %v103 = vld [vmem:[#allocation2 + $0x1d8] sm:$0xff]
    %v104 = vld [vmem:[#allocation2 + $0x1e0] sm:$0xff]
    %v105 = vld [vmem:[#allocation2 + $0x1e8] sm:$0xff]
    %v106 = vld [vmem:[#allocation2 + $0x1f0] sm:$0xff]
    %v107 = vld [vmem:[#allocation2 + $0x1f8] sm:$0xff]
    %v108 = vld [vmem:[#allocation2 + $0x200] sm:$0xff]
    %v109 = vld [vmem:[#allocation2 + $0x208] sm:$0xff]
    %v110 = vld [vmem:[#allocation2 + $0x210] sm:$0xff]
    %v111 = vld [vmem:[#allocation2 + $0x218] sm:$0xff]
    %v112 = vld [vmem:[#allocation2 + $0x220] sm:$0xff]
    %v113 = vld [vmem:[#allocation2 + $0x228] sm:$0xff]
    %v114 = vld [vmem:[#allocation2 + $0x230] sm:$0xff]
    %v115 = vld [vmem:[#allocation2 + $0x238] sm:$0xff]
    %v116 = vld [vmem:[#allocation2 + $0x240] sm:$0xff]
    %v117 = vld [vmem:[#allocation2 + $0x248] sm:$0xff]
    %v118 = vld [vmem:[#allocation2 + $0x250] sm:$0xff]
    %v119 = vld [vmem:[#allocation2 + $0x258] sm:$0xff]
    %v120 = vld [vmem:[#allocation2 + $0x260] sm:$0xff]
    %v121 = vld [vmem:[#allocation2 + $0x268] sm:$0xff]
    %v122 = vld [vmem:[#allocation2 + $0x270] sm:$0xff]
    %v123 = vld [vmem:[#allocation2 + $0x278] sm:$0xff]
    %v124 = vld [vmem:[#allocation2 + $0x280] sm:$0xff]
    %v125 = vld [vmem:[#allocation2 + $0x288] sm:$0xff]
    %v126 = vld [vmem:[#allocation2 + $0x290] sm:$0xff]
    %v127 = vld [vmem:[#allocation2 + $0x298] sm:$0xff]
    %v128 = vld [vmem:[#allocation2 + $0x2a0] sm:$0xff]
    %v129 = vld [vmem:[#allocation2 + $0x2a8] sm:$0xff]
    %v130 = vld [vmem:[#allocation2 + $0x2b0] sm:$0xff]
    %v131 = vld [vmem:[#allocation2 + $0x2b8] sm:$0xff]
    %v132 = vld [vmem:[#allocation2 + $0x2c0] sm:$0xff]
    %v133 = vld [vmem:[#allocation2 + $0x2c8] sm:$0xff]
    %v134 = vld [vmem:[#allocation2 + $0x2d0] sm:$0xff]
    %v135 = vld [vmem:[#allocation2 + $0x2d8] sm:$0xff]
    %v136 = vld [vmem:[#allocation2 + $0x2e0] sm:$0xff]
    %v137 = vld [vmem:[#allocation2 + $0x2e8] sm:$0xff]
    %v138 = vld [vmem:[#allocation2 + $0x2f0] sm:$0xff]
    %v139 = vld [vmem:[#allocation2 + $0x2f8] sm:$0xff]
    %v140 = vld [vmem:[#allocation2 + $0x300] sm:$0xff]
    %v141 = vld [vmem:[#allocation2 + $0x308] sm:$0xff]
    %v142 = vld [vmem:[%s2] sm:$0x1]
    %v144 = vperm.slane %v142, 0
    %vm146 = vcmask 130048
    %v148 = vsel %vm146, %v43, 0
    %150 = vmatpush.msra.mxu0 %v59
    %151 = vmatpush.msra.mxu0 %v58
    %152 = vmatpush.msra.mxu0 %v57
    %153 = vmatpush.msra.mxu0 %v56
    %154 = vmatpush.msra.mxu0 %v55
    %155 = vmatpush.msra.mxu0 %v54
    %156 = vmatpush.msra.mxu0 %v53
    %157 = vmatpush.msra.mxu0 %v52
    %158 = vmatpush.msra.mxu0 %v51
    %159 = vmatpush.msra.mxu0 %v50
    %160 = vmatpush.msra.mxu0 %v49
    %161 = vmatpush.msra.mxu0 %v48
    %162 = vmatpush.msra.mxu0 %v47
    %163 = vmatpush.msra.mxu0 %v46
    %164 = vmatpush.msra.mxu0 %v45
    %165 = vmatpush.msra.mxu0 %v44
    %166 = vmatmul.f32.gmra.mxu0 %v37
    %v167 = vpop.f32.mrf.mxu0
    %v168 = vadd.f32 %v144, %v167
    %169 = vdwg.mxu0
    %170 = vmatpush.msra.mxu0 %v75
    %171 = vmatpush.msra.mxu0 %v74
    %172 = vmatpush.msra.mxu0 %v73
    %173 = vmatpush.msra.mxu0 %v72
    %174 = vmatpush.msra.mxu0 %v71
    %175 = vmatpush.msra.mxu0 %v70
    %176 = vmatpush.msra.mxu0 %v69
    %177 = vmatpush.msra.mxu0 %v68
    %178 = vmatpush.msra.mxu0 %v67
    %179 = vmatpush.msra.mxu0 %v66
    %180 = vmatpush.msra.mxu0 %v65
    %181 = vmatpush.msra.mxu0 %v64
    %182 = vmatpush.msra.mxu0 %v63
    %183 = vmatpush.msra.mxu0 %v62
    %184 = vmatpush.msra.mxu0 %v61
    %185 = vmatpush.msra.mxu0 %v60
    %186 = vmatmul.f32.gmra.mxu0 %v38
    %v187 = vpop.f32.mrf.mxu0
    %v188 = vadd.f32 %v168, %v187
    %189 = vdwg.mxu0
    %190 = vmatpush.msra.mxu0 %v91
    %191 = vmatpush.msra.mxu0 %v90
    %192 = vmatpush.msra.mxu0 %v89
    %193 = vmatpush.msra.mxu0 %v88
    %194 = vmatpush.msra.mxu0 %v87
    %195 = vmatpush.msra.mxu0 %v86
    %196 = vmatpush.msra.mxu0 %v85
    %197 = vmatpush.msra.mxu0 %v84
    %198 = vmatpush.msra.mxu0 %v83
    %199 = vmatpush.msra.mxu0 %v82
    %200 = vmatpush.msra.mxu0 %v81
    %201 = vmatpush.msra.mxu0 %v80
    %202 = vmatpush.msra.mxu0 %v79
    %203 = vmatpush.msra.mxu0 %v78
    %204 = vmatpush.msra.mxu0 %v77
    %205 = vmatpush.msra.mxu0 %v76
    %206 = vmatmul.f32.gmra.mxu0 %v39
    %v207 = vpop.f32.mrf.mxu0
    %v208 = vadd.f32 %v188, %v207
    %209 = vdwg.mxu0
    %210 = vmatpush.msra.mxu0 %v107
    %211 = vmatpush.msra.mxu0 %v106
    %212 = vmatpush.msra.mxu0 %v105
    %213 = vmatpush.msra.mxu0 %v104
    %214 = vmatpush.msra.mxu0 %v103
    %215 = vmatpush.msra.mxu0 %v102
    %216 = vmatpush.msra.mxu0 %v101
    %217 = vmatpush.msra.mxu0 %v100
    %218 = vmatpush.msra.mxu0 %v99
    %219 = vmatpush.msra.mxu0 %v98
    %220 = vmatpush.msra.mxu0 %v97
    %221 = vmatpush.msra.mxu0 %v96
    %222 = vmatpush.msra.mxu0 %v95
    %223 = vmatpush.msra.mxu0 %v94
    %224 = vmatpush.msra.mxu0 %v93
    %225 = vmatpush.msra.mxu0 %v92
    %226 = vmatmul.f32.gmra.mxu0 %v40
    %v227 = vpop.f32.mrf.mxu0
    %v228 = vadd.f32 %v208, %v227
    %229 = vdwg.mxu0
    %230 = vmatpush.msra.mxu0 %v123
    %231 = vmatpush.msra.mxu0 %v122
    %232 = vmatpush.msra.mxu0 %v121
    %233 = vmatpush.msra.mxu0 %v120
    %234 = vmatpush.msra.mxu0 %v119
    %235 = vmatpush.msra.mxu0 %v118
    %236 = vmatpush.msra.mxu0 %v117
    %237 = vmatpush.msra.mxu0 %v116
    %238 = vmatpush.msra.mxu0 %v115
    %239 = vmatpush.msra.mxu0 %v114
    %240 = vmatpush.msra.mxu0 %v113
    %241 = vmatpush.msra.mxu0 %v112
    %242 = vmatpush.msra.mxu0 %v111
    %243 = vmatpush.msra.mxu0 %v110
    %244 = vmatpush.msra.mxu0 %v109
    %245 = vmatpush.msra.mxu0 %v108
    %246 = vmatmul.f32.gmra.mxu0 %v41
    %v247 = vpop.f32.mrf.mxu0
    %v248 = vadd.f32 %v228, %v247
    %249 = vdwg.mxu0
    %250 = vmatpush.msra.mxu0 %v139
    %251 = vmatpush.msra.mxu0 %v138
    %252 = vmatpush.msra.mxu0 %v137
    %253 = vmatpush.msra.mxu0 %v136
    %254 = vmatpush.msra.mxu0 %v135
    %255 = vmatpush.msra.mxu0 %v134
    %256 = vmatpush.msra.mxu0 %v133
    %257 = vmatpush.msra.mxu0 %v132
    %258 = vmatpush.msra.mxu0 %v131
    %259 = vmatpush.msra.mxu0 %v130
    %260 = vmatpush.msra.mxu0 %v129
    %261 = vmatpush.msra.mxu0 %v128
    %262 = vmatpush.msra.mxu0 %v127
    %263 = vmatpush.msra.mxu0 %v126
    %264 = vmatpush.msra.mxu0 %v125
    %265 = vmatpush.msra.mxu0 %v124
    %266 = vmatmul.f32.gmra.mxu0 %v42
    %v267 = vpop.f32.mrf.mxu0
    %v268 = vadd.f32 %v248, %v267
    %269 = vdwg.mxu0
    %270 = vmatpush.msra.mxu0 0.0
    %271 = vmatpush.msra.mxu0 0.0
    %272 = vmatpush.msra.mxu0 0.0
    %273 = vmatpush.msra.mxu0 0.0
    %274 = vmatpush.msra.mxu0 0.0
    %275 = vmatpush.msra.mxu0 0.0
    %276 = vmatpush.msra.mxu0 0.0
    %277 = vmatpush.msra.mxu0 0.0
    %278 = vmatpush.msra.mxu0 0.0
    %279 = vmatpush.msra.mxu0 0.0
    %280 = vmatpush.msra.mxu0 0.0
    %281 = vmatpush.msra.mxu0 0.0
    %282 = vmatpush.msra.mxu0 0.0
    %283 = vmatpush.msra.mxu0 0.0
    %284 = vmatpush.msra.mxu0 %v141
    %285 = vmatpush.msra.mxu0 %v140
    %286 = vmatmul.f32.gmra.mxu0 %v148
    %v287 = vpop.f32.mrf.mxu0
    %v288 = vadd.f32 %v268, %v287
    %289 = vdwg.mxu0
    %v290 = vmax.f32 %v288, 0.0
    %v291 = vld [vmem:[%s3] sm:$0xff]
    %v292 = vld [vmem:[%s3 + $0x8] sm:$0xff]
    %v293 = vld [vmem:[%s3 + $0x10] sm:$0xff]
    %v294 = vld [vmem:[%s3 + $0x18] sm:$0xff]
    %v295 = vld [vmem:[%s3 + $0x20] sm:$0xff]
    %v296 = vld [vmem:[%s3 + $0x28] sm:$0xff]
    %v297 = vld [vmem:[%s3 + $0x30] sm:$0xff]
    %v298 = vld [vmem:[%s3 + $0x38] sm:$0xff]
    %v299 = vld [vmem:[%s3 + $0x40] sm:$0xff]
    %v300 = vld [vmem:[%s3 + $0x48] sm:$0xff]
    %v301 = vld [vmem:[%s3 + $0x50] sm:$0xff]
    %v302 = vld [vmem:[%s3 + $0x58] sm:$0xff]
    %v303 = vld [vmem:[%s3 + $0x60] sm:$0xff]
    %v304 = vld [vmem:[%s3 + $0x68] sm:$0xff]
    %v305 = vld [vmem:[%s3 + $0x70] sm:$0xff]
    %v306 = vld [vmem:[%s3 + $0x78] sm:$0xff]
    %v307 = vld [vmem:[%s4] sm:$0x1]
    %v309 = vperm.slane %v307, 0
    %311 = vmatpush.msra.mxu0 %v306
    %312 = vmatpush.msra.mxu0 %v305
    %313 = vmatpush.msra.mxu0 %v304
    %314 = vmatpush.msra.mxu0 %v303
    %315 = vmatpush.msra.mxu0 %v302
    %316 = vmatpush.msra.mxu0 %v301
    %317 = vmatpush.msra.mxu0 %v300
    %318 = vmatpush.msra.mxu0 %v299
    %319 = vmatpush.msra.mxu0 %v298
    %320 = vmatpush.msra.mxu0 %v297
    %321 = vmatpush.msra.mxu0 %v296
    %322 = vmatpush.msra.mxu0 %v295
    %323 = vmatpush.msra.mxu0 %v294
    %324 = vmatpush.msra.mxu0 %v293
    %325 = vmatpush.msra.mxu0 %v292
    %326 = vmatpush.msra.mxu0 %v291
    %327 = vmatmul.f32.gmra.mxu0 %v290
    %v328 = vpop.f32.mrf.mxu0
    %v329 = vadd.f32 %v309, %v328
    %330 = vdwg.mxu0
    %vm331 = vcmask 80896
    %332 = vst.msk [vmem:[#allocation5] sm:$0xff] %vm331, %v329
    // Predicated region
    $region26: #{simple_nn_forward.1} parent=1 // pred_check
      _
    $region27: #{simple_nn_forward.1} parent=1 // pred_check_branch
      %334 = sbr.rel (0) target = $region29
    $region28: #{simple_nn_forward.1} parent=1 // pred_region
      %336 = vsyncadd [#allocation4], 0
      %s338 = sshll.u32 [#allocation5], 4
      %s339 = int_to_ptr.vmem [resolvable:$true] %s338
      %s340 = sshll.u32 %s5, 4
      %s341 = int_to_ptr.hbm [resolvable:$true] %s340
      %343 = dma.vmem_to_hbm [thread:$0]  %s339, 128, %s341, [#allocation4]
    $region29: #{simple_nn_forward.1} parent=1 // pred_fallthru
      _
    // Predicated region
    $region30: #{simple_nn_forward.1} parent=1 // pred_check
      _
    $region31: #{simple_nn_forward.1} parent=1 // pred_check_branch
      %345 = sbr.rel (0) target = $region33
    $region32: #{simple_nn_forward.1} parent=1 // pred_region
      %347 = dma.done [#allocation4], 128
    $region33: #{simple_nn_forward.1} parent=1 // pred_fallthru
      _
    %348 = vsyncpa [#allocation3], 1
    %349 = vsyncpa [#allocation4], 1

</llo_original>
